<compile_context>
chip_gen: v6e
topology: v6e:2x2x1
jax: 0.10.0
libtpu: 0.0.40
codegen_flags: <defaults>
</compile_context>

<pallas_src>
import functools

import jax
import jax.numpy as jnp
from jax.experimental import pallas as pl
from jax.experimental.pallas import tpu as pltpu


def _round_up(x, m):
    return pl.cdiv(x, m) * m


def _invariant_spec(block_shape, index_map):
    """BlockSpec for grid-invariant operands (weights / biases): request single
    buffering so they are not double-buffered in VMEM (matters at production
    model_dim).  Falls back to a plain BlockSpec if the jax version does not
    support pipeline_mode."""
    try:
        return pl.BlockSpec(block_shape, index_map, pipeline_mode=pl.Buffered(1))
    except (TypeError, AttributeError):
        return pl.BlockSpec(block_shape, index_map)


def _apply_bias_act(acc, bias, act):
    acc = acc + bias
    if act == "silu":
        # divide on the EUP slot (exp is already there) instead of a VALU divide
        acc = acc * pl.reciprocal(1.0 + jnp.exp(-acc), approx=True)
    elif act == "relu":
        acc = jnp.maximum(acc, 0.0)
    return acc


# ----------------------------------------------------------------------------
# Generic fused GEMM + bias + activation
#   * K fits in one tile  -> no scratch accumulator, write o_ref directly
#   * K tiled             -> f32 VMEM accumulator initialised by the first dot
# ----------------------------------------------------------------------------
def _linear_kernel_nok(x_ref, w_ref, b_ref, o_ref, *, act):
    acc = jnp.dot(x_ref[...], w_ref[...], preferred_element_type=jnp.float32)
    o_ref[...] = _apply_bias_act(acc, b_ref[...], act).astype(o_ref.dtype)


def _linear_kernel_acc(x_ref, w_ref, b_ref, o_ref, acc_ref, *, act):
    k = pl.program_id(2)
    part = jnp.dot(x_ref[...], w_ref[...], preferred_element_type=jnp.float32)

    @pl.when(k == 0)
    def _():
        acc_ref[...] = part          # init with the first dot (no zero round-trip)

    @pl.when(k > 0)
    def _():
        acc_ref[...] += part

    @pl.when(k == pl.num_programs(2) - 1)
    def _():
        o_ref[...] = _apply_bias_act(acc_ref[...], b_ref[...], act).astype(o_ref.dtype)


def pallas_linear(x, w, b, act="none", out_dtype=jnp.float32):
    """out = act(x @ w + b).  x: [M, K], w: [K, N], b: [N] -> [M, N]."""
    M, K = x.shape
    Kw, N = w.shape
    assert K == Kw, (K, Kw)
    x = x.astype(jnp.bfloat16)                 # halve x DMA bytes (per review)
    w = w.astype(jnp.bfloat16)
    # row tile: prefer >=2 row tiles once M >= 16 (v7x has 2 TensorCores)
    if M > 512:
        tm = 512
    elif M >= 16:
        tm = max(8, _round_up(pl.cdiv(M, 2), 8))
    else:
        tm = max(8, _round_up(M, 8))
    tn = 512 if N > 512 else N
    tk = 512 if K > 512 else K
    Mp, Np, Kp = _round_up(M, tm), _round_up(N, tn), _round_up(K, tk)
    if Mp != M or Kp != K:
        x = jnp.pad(x, ((0, Mp - M), (0, Kp - K)))
    if Kp != K or Np != N:
        w = jnp.pad(w, ((0, Kp - K), (0, Np - N)))
    b2 = jnp.pad(b.astype(jnp.float32), (0, Np - N)).reshape(1, Np)
    nk = Kp // tk

    if nk == 1:
        out = pl.pallas_call(
            functools.partial(_linear_kernel_nok, act=act),
            out_shape=jax.ShapeDtypeStruct((Mp, Np), out_dtype),
            grid=(Mp // tm, Np // tn),
            in_specs=[
                pl.BlockSpec((tm, Kp), lambda i, j: (i, 0)),
                pl.BlockSpec((Kp, tn), lambda i, j: (0, j)),
                pl.BlockSpec((1, tn), lambda i, j: (0, j)),
            ],
            out_specs=pl.BlockSpec((tm, tn), lambda i, j: (i, j)),
            compiler_params=pltpu.CompilerParams(
                dimension_semantics=("parallel", "parallel")),
        )(x, w, b2)
    else:
        out = pl.pallas_call(
            functools.partial(_linear_kernel_acc, act=act),
            out_shape=jax.ShapeDtypeStruct((Mp, Np), out_dtype),
            grid=(Mp // tm, Np // tn, nk),
            in_specs=[
                pl.BlockSpec((tm, tk), lambda i, j, k: (i, k)),
                pl.BlockSpec((tk, tn), lambda i, j, k: (k, j)),
                pl.BlockSpec((1, tn), lambda i, j, k: (0, j)),
            ],
            out_specs=pl.BlockSpec((tm, tn), lambda i, j, k: (i, j)),
            scratch_shapes=[pltpu.VMEM((tm, tn), jnp.float32)],
            compiler_params=pltpu.CompilerParams(
                dimension_semantics=("parallel", "parallel", "arbitrary")),
        )(x, w, b2)
    return out[:M, :N]


# ----------------------------------------------------------------------------
# Fused audio MLP: Linear(audio_dim, D) -> SiLU -> Linear(D, D), one pallas_call
# ----------------------------------------------------------------------------
def _audio_mlp_kernel(x_ref, w1_ref, b1_ref, w2_ref, b2_ref, o_ref):
    x = x_ref[...]                                              # bf16
    h = jnp.dot(x, w1_ref[...], preferred_element_type=jnp.float32) + b1_ref[...]
    h = h * pl.reciprocal(1.0 + jnp.exp(-h), approx=True)       # SiLU (EUP divide)
    h = h.astype(jnp.bfloat16)
    o = jnp.dot(h, w2_ref[...], preferred_element_type=jnp.float32) + b2_ref[...]
    o_ref[...] = o.astype(o_ref.dtype)


def audio_mlp(x, w1, b1, w2, b2, out_dtype=jnp.float32):
    """Weights are grid-invariant (single-buffered); rows are tiled.
    TODO(synk): at production model_dim=5120 the weights must be N/K tiled."""
    M, K = x.shape
    N1, N2 = w1.shape[1], w2.shape[1]
    x = x.astype(jnp.bfloat16)
    if M >= 16:
        tm = min(512, max(8, _round_up(pl.cdiv(M, 2), 8)))      # >=2 row tiles
    else:
        tm = max(8, _round_up(M, 8))   # M<16 cannot split below the 8-sublane tile
    Mp = _round_up(M, tm)
    if Mp != M:
        x = jnp.pad(x, ((0, Mp - M), (0, 0)))
    out = pl.pallas_call(
        _audio_mlp_kernel,
        out_shape=jax.ShapeDtypeStruct((Mp, N2), out_dtype),
        grid=(Mp // tm,),
        in_specs=[
            pl.BlockSpec((tm, K), lambda i: (i, 0)),
            _invariant_spec((K, N1), lambda i: (0, 0)),
            _invariant_spec((1, N1), lambda i: (0, 0)),
            _invariant_spec((N1, N2), lambda i: (0, 0)),
            _invariant_spec((1, N2), lambda i: (0, 0)),
        ],
        out_specs=pl.BlockSpec((tm, N2), lambda i: (i, 0)),
        compiler_params=pltpu.CompilerParams(dimension_semantics=("parallel",)),
    )(x, w1.astype(jnp.bfloat16), b1.astype(jnp.float32).reshape(1, N1),
      w2.astype(jnp.bfloat16), b2.astype(jnp.float32).reshape(1, N2))
    return out[:M]


# ----------------------------------------------------------------------------
# Fused Conv3d (kernel 3, padding 1, stride (1,sh,sw)) + bias + ReLU
# Taps folded into K; only surviving output rows are computed and stored.
# ----------------------------------------------------------------------------
def pack_conv3d_weights(w, b, *, fold_kd):
    """torch Conv3d weight [Cout, Cin, 3, 3, 3] / bias [Cout] ->
    (wf [T, K, Coutp] bf16, bias [1, Coutp] f32, Cout):
      fold_kd=True  -> T=1, K=27*Cin (all taps folded; use when Cin is small)
      fold_kd=False -> T=3, K=9*Cin  ((kh,kw) folded; kd stays as shifted windows)
    Coutp is padded to a multiple of 128 so conv stores stay lane-dense even when
    Cout = model_dim//4 is small."""
    Cout, Cin = int(w.shape[0]), int(w.shape[1])
    Coutp = max(128, _round_up(Cout, 128))
    if Coutp != Cout:
        w = jnp.pad(w, ((0, Coutp - Cout), (0, 0), (0, 0), (0, 0), (0, 0)))
        b = jnp.pad(b, (0, Coutp - Cout))
    wt = jnp.transpose(w, (2, 3, 4, 1, 0))          # [kd, kh, kw, Cin, Coutp]
    if fold_kd:
        wf = wt.reshape(1, 27 * Cin, Coutp)
    else:
        wf = wt.reshape(3, 9 * Cin, Coutp)
    return wf.astype(jnp.bfloat16), b.astype(jnp.float32).reshape(1, Coutp), Cout


def _fold_taps(xp, sh, sw, ho, wo, *, fold_kd, d_out):
    """Gather the (kh, kw[, kd]) taps into the channel axis with the output stride
    applied (stride-aware partial im2col), so the Pallas kernel sees a dense K and
    computes only surviving output positions."""
    kds = range(3) if fold_kd else (None,)
    parts = []
    for kd in kds:
        xd = xp if kd is None else xp[:, kd:kd + d_out]
        for kh in range(3):
            for kw in range(3):
                parts.append(
                    xd[:, :, kh:kh + sh * (ho - 1) + 1:sh,
                       kw:kw + sw * (wo - 1) + 1:sw, :])
    return jnp.concatenate(parts, axis=-1)


def _conv_taps_kernel(x_ref, w_ref, b_ref, o_ref, *, taps, plane, tile_rows,
                      act, tiled):
    """One (batch, row-tile) step: out_tile = act(sum_t x[window_t] @ w[t] + b).

    taps==1: all 27 conv taps folded into K -> a single MXU matmul.
    taps==3: (kh,kw) folded into K; the 3 depth taps are overlapping, sublane-
    aligned row windows (offsets are multiples of `plane`) of the VMEM slab.
    No scratch accumulator: the first dot initialises the sum and the remaining
    dots are chained (no zero-init / RMW round-trips)."""

    def window(t):
        if tiled:
            r0 = pl.program_id(1) * tile_rows + t * plane
            if tile_rows % 8 == 0 and plane % 8 == 0:
                r0 = pl.multiple_of(r0, 8)
            return x_ref[0, pl.ds(r0, tile_rows), :]
        off = t * plane
        return x_ref[0, off:off + tile_rows, :]

    acc = jnp.dot(window(0), w_ref[0], preferred_element_type=jnp.float32)
    for t in range(1, taps):
        acc = acc + jnp.dot(window(t), w_ref[t],
                            preferred_element_type=jnp.float32)
    acc = acc + b_ref[...]
    if act == "relu":
        acc = jnp.maximum(acc, 0.0)
    o_ref[0] = acc.astype(o_ref.dtype)


def conv3d_relu_fused(x, wf, b2, cout, *, strides=(1, 1, 1), act="relu",
                      out_dtype=jnp.bfloat16):
    """3-D conv (cross-correlation), kernel 3, padding 1, like nn.Conv3d.

    x: [B, D, H, W, Cin] channels-last; (wf, b2, cout) from pack_conv3d_weights.
    strides = (1, sh, sw); depth stride must be 1 (true for the module).
    Returns [B, D, Ho, Wo, cout] channels-last.

    The (kh,kw[,kd]) taps are folded into the channel/K axis with the stride
    applied (so only kept output positions are computed) and the kernel does 1 or
    3 MXU matmuls per row tile with K = 9*Cin or 27*Cin.
    TODO(synk): at production WanT2V sizes build the fold VMEM-locally in-kernel
    and row-window the input DMA instead of loading the whole per-batch slab."""
    B, D, H, W, Cin = x.shape
    sd, sh, sw = strides
    assert sd == 1, "depth stride != 1 not used by the module"
    T, K, Coutp = wf.shape
    Ho = (H + 2 - 3) // sh + 1
    Wo = (W + 2 - 3) // sw + 1
    plane = Ho * Wo
    rows_out = D * plane

    xp = jnp.pad(x.astype(jnp.bfloat16), ((0, 0), (1, 1), (1, 1), (1, 1), (0, 0)))
    xf = _fold_taps(xp, sh, sw, Ho, Wo, fold_kd=(T == 1), d_out=D)
    assert int(xf.shape[-1]) == K, (xf.shape, K)
    rows_in = int(xf.shape[1]) * plane
    xf = xf.reshape(B, rows_in, K)

    # row tiling: >=2 grid steps per batch element when the slab is big enough
    # (v7x: 2 TensorCores); otherwise a single static-slice step.
    nrt, tile_rows = 1, rows_out
    for cand in (4, 2):
        if (rows_out % cand == 0 and (rows_out // cand) % 8 == 0
                and rows_out // cand >= 256):
            nrt, tile_rows = cand, rows_out // cand
            break
    tiled = nrt > 1

    kernel = functools.partial(_conv_taps_kernel, taps=T, plane=plane,
                               tile_rows=tile_rows, act=act, tiled=tiled)
    y = pl.pallas_call(
        kernel,
        out_shape=jax.ShapeDtypeStruct((B, rows_out, Coutp), out_dtype),
        grid=(B, nrt),
        in_specs=[
            pl.BlockSpec((1, rows_in, K), lambda b, r: (b, 0, 0)),
            _invariant_spec((T, K, Coutp), lambda b, r: (0, 0, 0)),
            _invariant_spec((1, Coutp), lambda b, r: (0, 0)),
        ],
        out_specs=pl.BlockSpec((1, tile_rows, Coutp), lambda b, r: (b, r, 0)),
        compiler_params=pltpu.CompilerParams(
            dimension_semantics=("parallel", "parallel")),
    )(xf, wf, b2)
    return y.reshape(B, D, Ho, Wo, Coutp)[..., :cout]


# ----------------------------------------------------------------------------
# CFG combine: uncond + scale * (cond - uncond)
# ----------------------------------------------------------------------------
def _cfg_kernel(scale_ref, u_ref, c_ref, o_ref):
    s = scale_ref[0]
    u = u_ref[...].astype(jnp.float32)
    c = c_ref[...].astype(jnp.float32)
    o_ref[...] = (u + s * (c - u)).astype(o_ref.dtype)


def pallas_cfg_combine(uncond, cond, scale):
    """The flattened latents are viewed (free contiguous reshape, no copy) as a
    lane-dense [rows, cols] slab whenever size % 128 == 0; only ragged sizes take
    one pad copy.  This kernel is HBM-bandwidth bound, so avoiding the two
    pad+reshape copies of the previous version ~halves its HBM traffic."""
    shape, dtype = uncond.shape, uncond.dtype
    flat = int(uncond.size)
    u = uncond.reshape(-1)
    c = cond.reshape(-1)
    pad = (-flat) % 128
    if pad:                                      # rare ragged fallback
        u = jnp.pad(u, (0, pad))
        c = jnp.pad(c, (0, pad))
    total = flat + pad
    cols = 128
    for cand in (2048, 1024, 512, 256):
        if total % cand == 0:
            cols = cand
            break
    rows = total // cols
    u = u.reshape(rows, cols)
    c = c.reshape(rows, cols)
    tr = rows
    if rows >= 16:                               # >=2 row tiles when possible
        for cand in (1024, 512, 256, 128, 64, 32, 16, 8):
            if cand < rows and rows % cand == 0:
                tr = cand
                break
    s = jnp.asarray([scale], jnp.float32)
    out = pl.pallas_call(
        _cfg_kernel,
        out_shape=jax.ShapeDtypeStruct((rows, cols), dtype),
        grid=(rows // tr,),
        in_specs=[
            pl.BlockSpec(memory_space=pltpu.MemorySpace.SMEM),
            pl.BlockSpec((tr, cols), lambda i: (i, 0)),
            pl.BlockSpec((tr, cols), lambda i: (i, 0)),
        ],
        out_specs=pl.BlockSpec((tr, cols), lambda i: (i, 0)),
        compiler_params=pltpu.CompilerParams(dimension_semantics=("parallel",)),
    )(s, u, c)
    return out.reshape(-1)[:flat].reshape(shape)


# ----------------------------------------------------------------------------
# OmniHumanWanT2V (condition processors + CFG mix) in JAX/Pallas
# ----------------------------------------------------------------------------
class OmniHumanWanT2VPallas:
    def __init__(self, *, model_dim=128, audio_dim=64, num_keypoints=8,
                 num_frames=4, pose_hw=16, key=jax.random.PRNGKey(0)):
        self.model_dim = model_dim
        self.audio_dim = audio_dim
        self.num_keypoints = num_keypoints
        self.num_frames = num_frames
        self.pose_hw = pose_hw

        ks = jax.random.split(key, 16)
        s = 0.02
        bf = jnp.bfloat16

        # audio_processor: Linear(audio_dim, D) -> SiLU -> Linear(D, D)
        self.aw1 = (jax.random.normal(ks[0], (audio_dim, model_dim), jnp.float32) * s).astype(bf)
        self.ab1 = jnp.zeros((model_dim,), jnp.float32)
        self.aw2 = (jax.random.normal(ks[1], (model_dim, model_dim), jnp.float32) * s).astype(bf)
        self.ab2 = jnp.zeros((model_dim,), jnp.float32)

        # pose_processor: Conv3d(K,128) ReLU, Conv3d(128,256,s=(1,2,2)) ReLU,
        #                 Conv3d(256, model_dim//4, s=(1,2,2)) ReLU
        # (inter-layer activations kept in bf16; MXU accumulation is f32)
        c3 = model_dim // 4
        pw1 = jax.random.normal(ks[2], (128, num_keypoints, 3, 3, 3), jnp.float32) * s
        pw2 = jax.random.normal(ks[3], (256, 128, 3, 3, 3), jnp.float32) * s
        pw3 = jax.random.normal(ks[4], (c3, 256, 3, 3, 3), jnp.float32) * s
        # conv1: tiny Cin -> fold all 27 taps into K (single matmul, K=27*Cin)
        self.conv1 = pack_conv3d_weights(pw1, jnp.zeros((128,), jnp.float32), fold_kd=True)
        # conv2/conv3: fold (kh,kw) -> 3 depth-tap matmuls with K=9*Cin (1152/2304)
        self.conv2 = pack_conv3d_weights(pw2, jnp.zeros((256,), jnp.float32), fold_kd=False)
        self.conv3 = pack_conv3d_weights(pw3, jnp.zeros((c3,), jnp.float32), fold_kd=False)

        # pose_fc: in_features sized to the flattened (d, h, w) dims actually
        # produced at these small shapes.
        # TODO(synk): the reference hard-codes model_dim//4*16*16 (=8192) which does
        # not match its own conv output at generic shapes; at a real checkpoint the
        # hard-coded value must be used instead.
        fc_in = num_frames * (pose_hw // 4) ** 2
        self.fcw = (jax.random.normal(ks[5], (fc_in, model_dim), jnp.float32) * s).astype(bf)
        self.fcb = jnp.zeros((model_dim,), jnp.float32)

        # temporal embedding
        self.temporal_embed = (
            jax.random.normal(ks[6], (1, num_frames, model_dim), jnp.float32)
            / jnp.sqrt(jnp.float32(model_dim)))

        # condition_projector (defined in the reference __init__, unused in forward)
        self.cpw = (jax.random.normal(ks[7], (model_dim, model_dim), jnp.float32) * s).astype(bf)
        self.cpb = jnp.zeros((model_dim,), jnp.float32)

    # --- process_audio ------------------------------------------------------
    def process_audio(self, audio):
        """audio: [B, T, audio_dim] -> [B, T-1, 2*model_dim] (if T > 1)."""
        B, T, D = audio.shape
        tokens = audio_mlp(audio.reshape(B * T, D),
                           self.aw1, self.ab1, self.aw2, self.ab2)
        tokens = tokens.reshape(B, T, self.model_dim)
        if T > 1:
            tokens = jnp.concatenate([tokens[:, :-1], tokens[:, 1:]], axis=-1)
        return tokens

    # --- process_pose -------------------------------------------------------
    def process_pose(self, pose):
        """pose: [B, K, T, H, W] (channel axis = keypoints, as nn.Conv3d expects)
        -> [B, model_dim//4, model_dim]."""
        # channels-last end-to-end: [B, T(depth), H, W, K]; cast to bf16 once.
        x = jnp.transpose(pose, (0, 2, 3, 4, 1)).astype(jnp.bfloat16)
        x = conv3d_relu_fused(x, *self.conv1, strides=(1, 1, 1))
        x = conv3d_relu_fused(x, *self.conv2, strides=(1, 2, 2))
        x = conv3d_relu_fused(x, *self.conv3, strides=(1, 2, 2))
        # einops 'b t c h w -> b t (c h w)' on NCDHW output: conv channels are the
        # token axis, (d, h, w) are the features fed to pose_fc.
        B, D, Ho, Wo, Cout = x.shape
        x = jnp.transpose(x, (0, 4, 1, 2, 3)).reshape(B * Cout, D * Ho * Wo)
        tokens = pallas_linear(x, self.fcw, self.fcb)           # [B*Cout, model_dim]
        return tokens.reshape(B, Cout, self.model_dim)

    # --- prepare_conditions (the in-module parts) ---------------------------
    def prepare_conditions(self, audio=None, pose=None):
        conditions = {}
        batch_size = 1
        if audio is not None:
            batch_size = audio.shape[0]
            conditions["audio"] = self.process_audio(audio)
        if pose is not None:
            batch_size = pose.shape[0]
            conditions["pose"] = self.process_pose(pose)
        # TODO(synk): text (T5 encoder) and reference-image (WanT2V VAE.encode)
        # conditions require external pretrained models; no in-module compute.
        conditions["temporal"] = jnp.broadcast_to(
            self.temporal_embed, (batch_size, self.num_frames, self.model_dim))
        return conditions

    # --- forward (condition processing + CFG combine) -----------------------
    def forward(self, audio=None, pose=None, cfg_scale=7.5,
                num_inference_steps=4, latent_shape=(1, 8, 4, 16, 16),
                key=jax.random.PRNGKey(1)):
        conditions = self.prepare_conditions(audio=audio, pose=pose)

        # TODO(synk): the WanT2V DiT backbone, FlowDPMSolverMultistepScheduler.step
        # and VAE.decode are external pretrained components; the CFG mixing of the
        # diffusion loop IS implemented (pallas_cfg_combine) on synthetic
        # cond/uncond predictions.  Only the final step's guided prediction is
        # consumed here, so earlier (dead) CFG steps are not computed.
        k1, k2 = jax.random.split(key)
        uncond_pred = jax.random.normal(k1, latent_shape, jnp.float32)
        cond_pred = jax.random.normal(k2, latent_shape, jnp.float32)
        i = num_inference_steps - 1
        progress = i / num_inference_steps
        current_cfg = cfg_scale * (1.0 - progress) + 1.0 * progress
        guided = pallas_cfg_combine(uncond_pred, cond_pred, current_cfg)
        return conditions, guided


# ----------------------------------------------------------------------------
# Reference conv (for unit checks)
# ----------------------------------------------------------------------------
def _conv_ref(x, w, b, strides):
    w_ = jnp.transpose(w.astype(jnp.bfloat16).astype(jnp.float32), (2, 3, 4, 1, 0))
    y = jax.lax.conv_general_dilated(
        x.astype(jnp.float32), w_, window_strides=strides,
        padding=((1, 1), (1, 1), (1, 1)),
        dimension_numbers=("NDHWC", "DHWIO", "NDHWC"),
        precision=jax.lax.Precision.HIGHEST)
    return jnp.maximum(y + b, 0.0)


# ----------------------------------------------------------------------------
# Main
# ----------------------------------------------------------------------------
if __name__ == "__main__":
    # ---- unit check: folded conv kernel vs lax.conv (both fold paths) ------
    kc1, kc2 = jax.random.split(jax.random.PRNGKey(42))
    xc = jax.random.normal(kc1, (1, 3, 5, 6, 5), jnp.float32).astype(jnp.bfloat16)
    wc = jax.random.normal(kc2, (16, 5, 3, 3, 3), jnp.float32) * 0.1
    bc = jnp.full((16,), 0.05, jnp.float32)

    got1 = conv3d_relu_fused(xc, *pack_conv3d_weights(wc, bc, fold_kd=True),
                             strides=(1, 1, 1), out_dtype=jnp.float32)
    ref1 = _conv_ref(xc, wc, bc, (1, 1, 1))
    assert got1.shape == ref1.shape, (got1.shape, ref1.shape)
    assert jnp.allclose(got1, ref1, atol=5e-3, rtol=5e-3), \
        float(jnp.max(jnp.abs(got1 - ref1)))

    got2 = conv3d_relu_fused(xc, *pack_conv3d_weights(wc, bc, fold_kd=False),
                             strides=(1, 2, 2), out_dtype=jnp.float32)
    ref2 = _conv_ref(xc, wc, bc, (1, 2, 2))
    assert got2.shape == ref2.shape, (got2.shape, ref2.shape)
    assert jnp.allclose(got2, ref2, atol=5e-3, rtol=5e-3), \
        float(jnp.max(jnp.abs(got2 - ref2)))

    # ---- unit check: K-tiled GEMM accumulator path --------------------------
    kg1, kg2 = jax.random.split(jax.random.PRNGKey(5))
    xg = jax.random.normal(kg1, (96, 1280), jnp.float32)
    wg = jax.random.normal(kg2, (1280, 256), jnp.float32) * 0.05
    bg = jnp.linspace(-1.0, 1.0, 256, dtype=jnp.float32)
    gotg = pallas_linear(xg, wg, bg, act="relu")
    refg = jnp.maximum(
        jnp.dot(xg.astype(jnp.bfloat16).astype(jnp.float32),
                wg.astype(jnp.bfloat16).astype(jnp.float32),
                precision=jax.lax.Precision.HIGHEST) + bg, 0.0)
    assert jnp.allclose(gotg, refg, atol=3e-2, rtol=3e-2), \
        float(jnp.max(jnp.abs(gotg - refg)))

    # ---- unit check: CFG combine (no-copy path + ragged fallback) -----------
    ku1, ku2 = jax.random.split(jax.random.PRNGKey(7))
    u = jax.random.normal(ku1, (2, 8, 64), jnp.float32)        # 1024 elems
    c = jax.random.normal(ku2, (2, 8, 64), jnp.float32)
    g = pallas_cfg_combine(u, c, 2.5)
    assert jnp.allclose(g, u + 2.5 * (c - u), atol=1e-5)
    u2 = jax.random.normal(ku1, (3, 5, 7), jnp.float32)        # 105 elems (ragged)
    c2 = jax.random.normal(ku2, (3, 5, 7), jnp.float32)
    g2 = pallas_cfg_combine(u2, c2, 2.5)
    assert jnp.allclose(g2, u2 + 2.5 * (c2 - u2), atol=1e-5)

    # ---- full module-level run ----------------------------------------------
    key = jax.random.PRNGKey(0)
    k_audio, k_pose, k_params = jax.random.split(key, 3)

    B = 2
    model_dim = 128
    audio_dim = 64
    num_keypoints = 8
    num_frames = 4
    pose_hw = 16

    model = OmniHumanWanT2VPallas(
        model_dim=model_dim, audio_dim=audio_dim, num_keypoints=num_keypoints,
        num_frames=num_frames, pose_hw=pose_hw, key=k_params)

    # audio features [B, T, audio_dim]
    audio = jax.random.normal(k_audio, (B, num_frames, audio_dim), jnp.float32)
    # pose heatmaps, channel axis = keypoints: [B, K, T, H, W]
    pose = jax.random.normal(
        k_pose, (B, num_keypoints, num_frames, pose_hw, pose_hw), jnp.float32)

    latent_shape = (1, 8, num_frames, 16, 16)
    conditions, guided = model.forward(audio=audio, pose=pose, cfg_scale=7.5,
                                       num_inference_steps=4,
                                       latent_shape=latent_shape)

    jax.block_until_ready(conditions["audio"])
    jax.block_until_ready(conditions["pose"])
    jax.block_until_ready(conditions["temporal"])
    jax.block_until_ready(guided)

    # Sanity: shapes match the module's semantics at these small sizes.
    assert conditions["audio"].shape == (B, num_frames - 1, 2 * model_dim)
    assert conditions["pose"].shape == (B, model_dim // 4, model_dim)
    assert conditions["temporal"].shape == (B, num_frames, model_dim)
    assert guided.shape == latent_shape

    print("KERNEL_OK")
</pallas_src>

<mosaic_0001>
module attributes {stable_mosaic.version = 11 : i64} {
  func.func @_conv_taps_kernel(%arg0: i32, %arg1: i32, %arg2: memref<1x90x135xbf16, #tpu.memory_space<vmem>>, %arg3: memref<1x135x128xbf16, #tpu.memory_space<vmem>>, %arg4: memref<1x128xf32, #tpu.memory_space<vmem>>, %arg5: memref<1x90x128xf32, #tpu.memory_space<vmem>>) attributes {dimension_semantics = [#tpu.dimension_semantics<parallel>, #tpu.dimension_semantics<parallel>], iteration_bounds = array<i64: 1, 1>, scalar_prefetch = 0 : i64, scratch_operands = 0 : i64, tpu.core_type = #tpu.core_type<tc>, window_params = [{transform_indices = @transform_0, window_bounds = array<i64: 1, 90, 135>}, {pipeline_mode = #tpu.pipeline_mode<synchronous>, transform_indices = @transform_1, window_bounds = array<i64: 1, 135, 128>}, {pipeline_mode = #tpu.pipeline_mode<synchronous>, transform_indices = @transform_2, window_bounds = array<i64: 1, 128>}, {transform_indices = @transform_3, window_bounds = array<i64: 1, 90, 128>}]} {
    %c0 = arith.constant 0 : index
    %c0_0 = arith.constant 0 : index
    %c0_1 = arith.constant 0 : index
    %0 = vector.load %arg2[%c0, %c0_0, %c0_1] : memref<1x90x135xbf16, #tpu.memory_space<vmem>>, vector<1x90x135xbf16>
    %1 = vector.shape_cast %0 : vector<1x90x135xbf16> to vector<90x135xbf16>
    %c0_2 = arith.constant 0 : index
    %c0_3 = arith.constant 0 : index
    %c0_4 = arith.constant 0 : index
    %2 = vector.load %arg3[%c0_2, %c0_3, %c0_4] : memref<1x135x128xbf16, #tpu.memory_space<vmem>>, vector<1x135x128xbf16>
    %3 = vector.shape_cast %2 : vector<1x135x128xbf16> to vector<135x128xbf16>
    %cst = arith.constant dense<0.000000e+00> : vector<90x128xf32>
    %4 = tpu.matmul %1, %3, %cst {dimension_numbers = #tpu.dot_dimension_numbers<[1], [0], [0], [1], [0, 0, 1, 1], [], []>} : vector<90x135xbf16>, vector<135x128xbf16>, vector<90x128xf32> -> vector<90x128xf32>
    %c0_5 = arith.constant 0 : index
    %c0_6 = arith.constant 0 : index
    %5 = vector.load %arg4[%c0_5, %c0_6] : memref<1x128xf32, #tpu.memory_space<vmem>>, vector<1x128xf32>
    %6 = vector.broadcast %5 : vector<1x128xf32> to vector<90x128xf32>
    %7 = arith.addf %4, %6 : vector<90x128xf32>
    %cst_7 = arith.constant 0.000000e+00 : f32
    %8 = vector.broadcast %cst_7 : f32 to vector<90x128xf32>
    %9 = arith.maximumf %7, %8 : vector<90x128xf32>
    %c0_8 = arith.constant 0 : index
    %c0_9 = arith.constant 0 : index
    %c0_10 = arith.constant 0 : index
    %10 = vector.load %arg5[%c0_8, %c0_9, %c0_10] : memref<1x90x128xf32, #tpu.memory_space<vmem>>, vector<1x90x128xf32>
    %11 = vector.shape_cast %10 : vector<1x90x128xf32> to vector<90x128xf32>
    %12 = vector.shape_cast %9 : vector<90x128xf32> to vector<1x90x128xf32>
    tpu.vector_store %arg5[%c0_8, %c0_9, %c0_10], %12 {strides = array<i32>} : memref<1x90x128xf32, #tpu.memory_space<vmem>>, vector<1x90x128xf32>,
    return
  }
  func.func @transform_0(%arg0: i32, %arg1: i32) -> (i32, i32, i32) {
    %c0_i32 = arith.constant 0 : i32
    %c0_i32_0 = arith.constant 0 : i32
    %c0_i32_1 = arith.constant 0 : i32
    return %arg0, %c0_i32, %c0_i32_0 : i32, i32, i32
  }
  func.func @transform_1(%arg0: i32, %arg1: i32) -> (i32, i32, i32) {
    %c0_i32 = arith.constant 0 : i32
    %c0_i32_0 = arith.constant 0 : i32
    %c0_i32_1 = arith.constant 0 : i32
    %c0_i32_2 = arith.constant 0 : i32
    return %c0_i32, %c0_i32_0, %c0_i32_1 : i32, i32, i32
  }
  func.func @transform_2(%arg0: i32, %arg1: i32) -> (i32, i32) {
    %c0_i32 = arith.constant 0 : i32
    %c0_i32_0 = arith.constant 0 : i32
    %c0_i32_1 = arith.constant 0 : i32
    return %c0_i32, %c0_i32_0 : i32, i32
  }
  func.func @transform_3(%arg0: i32, %arg1: i32) -> (i32, i32, i32) {
    %c0_i32 = arith.constant 0 : i32
    %c0_i32_0 = arith.constant 0 : i32
    return %arg0, %arg1, %c0_i32 : i32, i32, i32
  }
}

</mosaic_0001>

<llo_original>
// kernel: tpu_custom_call.1
$region0: #{tpu_custom_call.1}
  #allocation0 [shape = 'u32[]', space=smem, size = 0x4, offset = 0x4, fixed_abs, tag = 'smem constant byte address 0x4 - core index']
  #allocation1 [shape = 'u32[144,128]{1,0:T(1,128)}', space=vmem, size = 0x12000, scoped, tag = 'internal scratch']
  %s0 = inlined_call_operand.vmem [shape: bf16[1,90,135], index: 0, kind: input, shape index: {}]
  %s1 = inlined_call_operand.vmem [shape: bf16[1,135,128], index: 1, kind: input, shape index: {}]
  %s2 = inlined_call_operand.vmem [shape: f32[1,128], index: 2, kind: input, shape index: {}]
  %s3 = inlined_call_operand.vmem [shape: f32[1,90,128], index: 3, kind: output, shape index: {}]
  %s4 = sld [smem:[#allocation0]]
  $region22: #{tpu_custom_call.1} parent=0
    _
  %s6 = ssub.s32 1, %s4
  %s7 = scalar_select 0, %s6, %s4
  // Predicated region
  $region2: #{tpu_custom_call.1} parent=0 // pred_check
    _
  $region3: #{tpu_custom_call.1} parent=0 // pred_check_branch
    %9 = sbr.rel (0) target = $region5
  $region4: #{tpu_custom_call.1} parent=0 // pred_region
    _
  $region5: #{tpu_custom_call.1} parent=0 // pred_fallthru
    _
  // Predicated region
  $region6: #{tpu_custom_call.1} parent=0 // pred_check
    _
  $region7: #{tpu_custom_call.1} parent=0 // pred_check_branch
    %11 = sbr.rel (0) target = $region9
  $region8: #{tpu_custom_call.1} parent=0 // pred_region
    _
  $region9: #{tpu_custom_call.1} parent=0 // pred_fallthru
    _
  // Predicated region
  $region10: #{tpu_custom_call.1} parent=0 // pred_check
    _
  $region11: #{tpu_custom_call.1} parent=0 // pred_check_branch
    %13 = sbr.rel (0) target = $region13
  $region12: #{tpu_custom_call.1} parent=0 // pred_region
    _
  $region13: #{tpu_custom_call.1} parent=0 // pred_fallthru
    _
  %v15 = vld [vmem:[%s0] sm:$0xff]
  %v16 = vld [vmem:[%s0 + $0x8] sm:$0xff]
  %v17 = vld [vmem:[%s0 + $0x10] sm:$0xff]
  %v18 = vld [vmem:[%s0 + $0x18] sm:$0xff]
  %v19 = vld [vmem:[%s0 + $0x20] sm:$0xff]
  %v20 = vld [vmem:[%s0 + $0x28] sm:$0xff]
  %v21 = vld [vmem:[%s0 + $0x30] sm:$0xff]
  %v22 = vld [vmem:[%s0 + $0x38] sm:$0xff]
  %v23 = vld [vmem:[%s0 + $0x40] sm:$0xff]
  %v24 = vld [vmem:[%s0 + $0x48] sm:$0xff]
  %v25 = vld [vmem:[%s0 + $0x50] sm:$0xff]
  %v26 = vld [vmem:[%s0 + $0x58] sm:$0x11]
  %v27 = vld [vmem:[%s1] sm:$0xf]
  %v28 = vld [vmem:[%s1 + $0x4] sm:$0xf]
  %v29 = vld [vmem:[%s1 + $0x8] sm:$0xf]
  %v30 = vld [vmem:[%s1 + $0xc] sm:$0xf]
  %v31 = vld [vmem:[%s1 + $0x10] sm:$0xf]
  %v32 = vld [vmem:[%s1 + $0x14] sm:$0xf]
  %v33 = vld [vmem:[%s1 + $0x18] sm:$0xf]
  %v34 = vld [vmem:[%s1 + $0x1c] sm:$0xf]
  %v35 = vld [vmem:[%s1 + $0x20] sm:$0xf]
  %v36 = vld [vmem:[%s1 + $0x24] sm:$0xf]
  %v37 = vld [vmem:[%s1 + $0x28] sm:$0xf]
  %v38 = vld [vmem:[%s1 + $0x2c] sm:$0xf]
  %v39 = vld [vmem:[%s1 + $0x30] sm:$0xf]
  %v40 = vld [vmem:[%s1 + $0x34] sm:$0xf]
  %v41 = vld [vmem:[%s1 + $0x38] sm:$0xf]
  %v42 = vld [vmem:[%s1 + $0x3c] sm:$0xf]
  %v43 = vld [vmem:[%s1 + $0x40] sm:$0xf]
  %v44 = vld [vmem:[%s2] sm:$0x1]
  %v46 = vlaneseq
  %v47 = vshrl.u32 %v46, 7
  %v48 = vsub.s32 0, %v47
  %v49 = vrot.slane %v44, %v48
  %v63 = vunpack.c.l.b16 %v15
  %v64 = vunpack.c.h.b16 %v15
  %v65 = vunpack.c.l.b16 %v16
  %v66 = vunpack.c.h.b16 %v16
  %v67 = vunpack.c.l.b16 %v17
  %v68 = vunpack.c.h.b16 %v17
  %v69 = vunpack.c.l.b16 %v18
  %v70 = vunpack.c.h.b16 %v18
  %v71 = vunpack.c.l.b16 %v19
  %v72 = vunpack.c.h.b16 %v19
  %v73 = vunpack.c.l.b16 %v20
  %v74 = vunpack.c.h.b16 %v20
  %v75 = vunpack.c.l.b16 %v21
  %v76 = vunpack.c.h.b16 %v21
  %v77 = vunpack.c.l.b16 %v22
  %v78 = vunpack.c.h.b16 %v22
  %v79 = vunpack.c.l.b16 %v23
  %v80 = vunpack.c.h.b16 %v23
  %v81 = vunpack.c.l.b16 %v24
  %v82 = vunpack.c.h.b16 %v24
  %v83 = vunpack.c.l.b16 %v25
  %v84 = vunpack.c.h.b16 %v25
  %v85 = vunpack.c.l.b16 %v26
  %v86 = vunpack.c.h.b16 %v26
  %v87 = vpack.c.b16 %v65, %v63
  %v88 = vpack.c.b16 %v66, %v64
  %v89 = vpack.c.b16 %v69, %v67
  %v90 = vpack.c.b16 %v70, %v68
  %v91 = vpack.c.b16 %v73, %v71
  %v92 = vpack.c.b16 %v74, %v72
  %v93 = vpack.c.b16 %v77, %v75
  %v94 = vpack.c.b16 %v78, %v76
  %v95 = vpack.c.b16 %v81, %v79
  %v96 = vpack.c.b16 %v82, %v80
  %v97 = vpack.c.b16 %v85, %v83
  %v98 = vpack.c.b16 %v86, %v84
  %v122 = vunpack.c.l.b16 %v27
  %v123 = vunpack.c.l.b16 %v28
  %v124 = vunpack.c.l.b16 %v29
  %v125 = vunpack.c.l.b16 %v30
  %v126 = vunpack.c.l.b16 %v31
  %v127 = vunpack.c.l.b16 %v32
  %v128 = vunpack.c.l.b16 %v33
  %v129 = vunpack.c.l.b16 %v34
  %v130 = vunpack.c.l.b16 %v35
  %v131 = vunpack.c.l.b16 %v36
  %v132 = vunpack.c.l.b16 %v37
  %v133 = vunpack.c.l.b16 %v38
  %v134 = vunpack.c.l.b16 %v39
  %v135 = vunpack.c.l.b16 %v40
  %v136 = vunpack.c.l.b16 %v41
  %v137 = vunpack.c.l.b16 %v42
  %v138 = vunpack.c.l.b16 %v43
  %v139 = vpack.c.b16 %v123, %v122
  %v140 = vpack.c.b16 %v125, %v124
  %v141 = vpack.c.b16 %v127, %v126
  %v142 = vpack.c.b16 %v129, %v128
  %v143 = vpack.c.b16 %v131, %v130
  %v144 = vpack.c.b16 %v133, %v132
  %v145 = vpack.c.b16 %v135, %v134
  %v146 = vpack.c.b16 %v137, %v136
  %v147 = vpack.c.b16 %v138, %v138
  %vm156 = vcmask 56320
  %v158 = vsel %vm156, %v88, 0
  %v161 = vsel %vm156, %v90, 0
  %v164 = vsel %vm156, %v92, 0
  %v167 = vsel %vm156, %v94, 0
  %v170 = vsel %vm156, %v96, 0
  %v173 = vsel %vm156, %v98, 0
  %vm175 = vcmask 1042432
  %vm176 = vcmask 1043456
  %v177 = vsel %vm175, 4294967295, 65535
  %v178 = vsel %vm176, %v177, 0
  %v180 = vand.u32 %v147, %v178
  %182 = vmatprep.subr.bf16.mxu0 0
  %183 = vmatpush1.bf16.msra.mxu0 %v146
  %184 = vmatprep.subr.bf16.mxu0 0
  %185 = vmatpush1.bf16.msra.mxu0 %v145
  %186 = vmatprep.subr.bf16.mxu0 0
  %187 = vmatpush1.bf16.msra.mxu0 %v144
  %188 = vmatprep.subr.bf16.mxu0 0
  %189 = vmatpush1.bf16.msra.mxu0 %v143
  %190 = vmatprep.subr.bf16.mxu0 0
  %191 = vmatpush1.bf16.msra.mxu0 %v142
  %192 = vmatprep.subr.bf16.mxu0 0
  %193 = vmatpush1.bf16.msra.mxu0 %v141
  %194 = vmatprep.subr.bf16.mxu0 0
  %195 = vmatpush1.bf16.msra.mxu0 %v140
  %196 = vmatprep.subr.bf16.mxu0 0
  %197 = vmatpush1.bf16.msra.mxu0 %v139
  %198 = vmatprep.subr.bf16.mxu0 0
  %199 = vmatpush2.bf16.msra.mxu0 0
  %200 = vmatprep.subr.bf16.mxu0 0
  %201 = vmatpush2.bf16.msra.mxu0 0
  %202 = vmatprep.subr.bf16.mxu0 0
  %203 = vmatpush2.bf16.msra.mxu0 0
  %204 = vmatprep.subr.bf16.mxu0 0
  %205 = vmatpush2.bf16.msra.mxu0 0
  %206 = vmatprep.subr.bf16.mxu0 0
  %207 = vmatpush2.bf16.msra.mxu0 0
  %208 = vmatprep.subr.bf16.mxu0 0
  %209 = vmatpush2.bf16.msra.mxu0 0
  %210 = vmatprep.subr.bf16.mxu0 0
  %211 = vmatpush2.bf16.msra.mxu0 0
  %212 = vmatprep.subr.bf16.mxu0 0
  %213 = vmatpush2.bf16.msra.mxu0 %v180
  %214 = vmatprep.mubr.bf16.mxu0 %v158
  %215 = vmatmul.mubr.bf16.gmra.mxu0 %v87
  %v216 = vpop.f32.mrf.mxu0
  %v217 = vadd.f32 %v49, %v216
  %v218 = vpop.f32.mrf.mxu0
  %v219 = vpop.f32.mrf.mxu0
  %v220 = vadd.f32 %v49, %v219
  %v221 = vpop.f32.mrf.mxu0
  %222 = vmatprep.mubr.bf16.mxu0 %v161
  %223 = vmatmul.mubr.bf16.gmra.mxu0 %v89
  %v224 = vpop.f32.mrf.mxu0
  %v225 = vadd.f32 %v49, %v224
  %v226 = vpop.f32.mrf.mxu0
  %v227 = vpop.f32.mrf.mxu0
  %v228 = vadd.f32 %v49, %v227
  %v229 = vpop.f32.mrf.mxu0
  %230 = vmatprep.mubr.bf16.mxu0 %v164
  %231 = vmatmul.mubr.bf16.gmra.mxu0 %v91
  %v232 = vpop.f32.mrf.mxu0
  %v233 = vadd.f32 %v49, %v232
  %v234 = vpop.f32.mrf.mxu0
  %v235 = vpop.f32.mrf.mxu0
  %v236 = vadd.f32 %v49, %v235
  %v237 = vpop.f32.mrf.mxu0
  %238 = vmatprep.mubr.bf16.mxu0 %v167
  %239 = vmatmul.mubr.bf16.gmra.mxu0 %v93
  %v240 = vpop.f32.mrf.mxu0
  %v241 = vadd.f32 %v49, %v240
  %v242 = vpop.f32.mrf.mxu0
  %v243 = vpop.f32.mrf.mxu0
  %v244 = vadd.f32 %v49, %v243
  %v245 = vpop.f32.mrf.mxu0
  %246 = vmatprep.mubr.bf16.mxu0 %v170
  %247 = vmatmul.mubr.bf16.gmra.mxu0 %v95
  %v248 = vpop.f32.mrf.mxu0
  %v249 = vadd.f32 %v49, %v248
  %v250 = vpop.f32.mrf.mxu0
  %v251 = vpop.f32.mrf.mxu0
  %v252 = vadd.f32 %v49, %v251
  %v253 = vpop.f32.mrf.mxu0
  %254 = vmatprep.mubr.bf16.mxu0 %v173
  %255 = vmatmul.mubr.bf16.gmra.mxu0 %v97
  %v256 = vpop.f32.mrf.mxu0
  %v257 = vadd.f32 %v49, %v256
  %v258 = vpop.f32.mrf.mxu0
  %v259 = vpop.f32.mrf.mxu0
  %v260 = vadd.f32 %v49, %v259
  %v261 = vpop.f32.mrf.mxu0
  %262 = vdwg.mxu0
  %v263 = vmax.f32 %v217, 0.0
  %v264 = vmax.f32 %v220, 0.0
  %v265 = vmax.f32 %v225, 0.0
  %v266 = vmax.f32 %v228, 0.0
  %v267 = vmax.f32 %v233, 0.0
  %v268 = vmax.f32 %v236, 0.0
  %v269 = vmax.f32 %v241, 0.0
  %v270 = vmax.f32 %v244, 0.0
  %v271 = vmax.f32 %v249, 0.0
  %v272 = vmax.f32 %v252, 0.0
  %v273 = vmax.f32 %v257, 0.0
  %v274 = vmax.f32 %v260, 0.0
  %275 = vst [vmem:[%s3] sm:$0xff] %v263
  %276 = vst [vmem:[%s3 + $0x8] sm:$0xff] %v264
  %277 = vst [vmem:[%s3 + $0x10] sm:$0xff] %v265
  %278 = vst [vmem:[%s3 + $0x18] sm:$0xff] %v266
  %279 = vst [vmem:[%s3 + $0x20] sm:$0xff] %v267
  %280 = vst [vmem:[%s3 + $0x28] sm:$0xff] %v268
  %281 = vst [vmem:[%s3 + $0x30] sm:$0xff] %v269
  %282 = vst [vmem:[%s3 + $0x38] sm:$0xff] %v270
  %283 = vst [vmem:[%s3 + $0x40] sm:$0xff] %v271
  %284 = vst [vmem:[%s3 + $0x48] sm:$0xff] %v272
  %285 = vst [vmem:[%s3 + $0x50] sm:$0xff] %v273
  %286 = vst [vmem:[%s3 + $0x58] sm:$0x3] %v274
  // Predicated region
  $region14: #{tpu_custom_call.1} parent=0 // pred_check
    _
  $region15: #{tpu_custom_call.1} parent=0 // pred_check_branch
    %288 = sbr.rel (0) target = $region17
  $region16: #{tpu_custom_call.1} parent=0 // pred_region
    _
  $region17: #{tpu_custom_call.1} parent=0 // pred_fallthru
    _
  // Predicated region
  $region18: #{tpu_custom_call.1} parent=0 // pred_check
    _
  $region19: #{tpu_custom_call.1} parent=0 // pred_check_branch
    %290 = sbr.rel (0) target = $region21
  $region20: #{tpu_custom_call.1} parent=0 // pred_region
    _
  $region21: #{tpu_custom_call.1} parent=0 // pred_fallthru
    _

</llo_original>
